<compile_context>
chip_gen: v5e
topology: v5e:2x2
jax: 0.10.0
libtpu: 0.0.40
codegen_flags: <defaults>
</compile_context>

<pallas_src>
import functools

import jax
import jax.numpy as jnp
from jax import lax
from jax.experimental import pallas as pl
from jax.experimental.pallas import tpu as pltpu


def _embed_layernorm_kernel(ids_ref, table_ref, gamma_ref, beta_ref,
                            out_ref, gather_ref, *, eps: float):
    """One grid step embeds + normalizes a tile of `tn` tokens.

    ids_ref    : (N_pad,) int32 SMEM  -- all token ids (scalar-prefetched)
    table_ref  : (V, D)   f32 VMEM    -- embedding table (resident, fetched once)
    gamma_ref  : (1, D)   f32 VMEM    -- LayerNorm weight
    beta_ref   : (1, D)   f32 VMEM    -- LayerNorm bias
    out_ref    : (tn, D)  f32 VMEM    -- output tile
    gather_ref : (tn, D)  f32 VMEM    -- scratch holding the gathered rows
    """
    tn = gather_ref.shape[0]
    vocab = table_ref.shape[0]
    base = pl.program_id(0) * tn

    # Row gather: scalar id from SMEM -> dynamic-slice one table row into scratch.
    def gather_row(j, carry):
        tok = ids_ref[base + j]
        # Clamp so an out-of-range id cannot trigger an unchecked OOB VMEM read
        # (torch.nn.Embedding would raise; here the contract is "ids in range").
        tok = jnp.minimum(jnp.maximum(tok, 0), vocab - 1)
        gather_ref[pl.ds(j, 1), :] = table_ref[pl.ds(tok, 1), :]
        return carry

    lax.fori_loop(0, tn, gather_row, 0, unroll=tn <= 32)

    # pos_tensor is identically zero (0 / 10000**d), so `emb + pos` is just `emb`.
    x = gather_ref[...]

    # LayerNorm over the feature dim (biased variance, eps inside rsqrt),
    # reusing (x - mean) so only two cross-lane reductions are needed.
    mean = jnp.mean(x, axis=-1, keepdims=True)
    xc = x - mean
    var = jnp.mean(xc * xc, axis=-1, keepdims=True)
    y = xc * lax.rsqrt(var + eps)
    out_ref[...] = y * gamma_ref[...] + beta_ref[...]


def iembedding_forward(input_ids, table, gamma, beta, *, eps=1e-5,
                       block_tokens=256):
    """input_ids: (B, S) int -> (B, S, D) float32 (== LayerNorm(Embedding(ids)))."""
    b, s = input_ids.shape
    v, d = table.shape
    n = b * s

    # Token tile: multiple of 8 sublanes (f32). Pad the flat token stream so the
    # grid divides evenly; pad ids are 0 (valid rows) and are sliced off below.
    tn = max(8, min(int(block_tokens), n))
    tn = (tn // 8) * 8
    n_pad = pl.cdiv(n, tn) * tn

    ids_flat = input_ids.reshape(n).astype(jnp.int32)
    if n_pad != n:
        ids_flat = jnp.pad(ids_flat, (0, n_pad - n))

    # TODO(synk): a bf16 table would halve HBM/VMEM traffic (stats stay f32);
    # kept f32 here for exact numerical parity with the torch module.
    table_f32 = table.astype(jnp.float32)
    gamma2 = gamma.reshape(1, d).astype(jnp.float32)
    beta2 = beta.reshape(1, d).astype(jnp.float32)

    # segment_tensor from forward() is dead code (never used) -> not ported.
    # TODO(synk): if D stays this small at production sizes, a lane-dense
    # (tn*D/128, 128) output slab would avoid masked partial stores.

    out = pl.pallas_call(
        functools.partial(_embed_layernorm_kernel, eps=eps),
        out_shape=jax.ShapeDtypeStruct((n_pad, d), jnp.float32),
        grid_spec=pltpu.PrefetchScalarGridSpec(
            num_scalar_prefetch=1,                      # ids -> SMEM
            grid=(n_pad // tn,),
            in_specs=[
                pl.BlockSpec((v, d), lambda i, ids: (0, 0)),   # table (VMEM resident)
                pl.BlockSpec((1, d), lambda i, ids: (0, 0)),   # gamma
                pl.BlockSpec((1, d), lambda i, ids: (0, 0)),   # beta
            ],
            out_specs=pl.BlockSpec((tn, d), lambda i, ids: (i, 0)),
            scratch_shapes=[pltpu.VMEM((tn, d), jnp.float32)],
        ),
        compiler_params=pltpu.CompilerParams(
            dimension_semantics=("parallel",)),         # token tiles are independent
    )(ids_flat, table_f32, gamma2, beta2)

    return out[:n].reshape(b, s, d)


def _reference(input_ids, table, gamma, beta, eps=1e-5):
    emb = table[input_ids]                               # (B, S, D); pos tensor is zero
    mean = jnp.mean(emb, axis=-1, keepdims=True)
    var = jnp.mean((emb - mean) ** 2, axis=-1, keepdims=True)
    return (emb - mean) * lax.rsqrt(var + eps) * gamma + beta


if __name__ == "__main__":
    # IEmbedding(embedding_dim=32, vocab_size=64) at small shapes.
    vocab_size = 64
    embedding_dim = 32
    batch, seq = 2, 8

    key = jax.random.PRNGKey(0)
    k_emb, k_ids, k_g, k_b = jax.random.split(key, 4)

    table = jax.random.normal(k_emb, (vocab_size, embedding_dim), dtype=jnp.float32)
    gamma = 1.0 + 0.1 * jax.random.normal(k_g, (embedding_dim,), dtype=jnp.float32)
    beta = 0.1 * jax.random.normal(k_b, (embedding_dim,), dtype=jnp.float32)

    input_ids = jax.random.randint(k_ids, (batch, seq), 0, vocab_size, dtype=jnp.int32)

    # block_tokens=8 -> a 2-step grid at these demo shapes (exercises pipelining
    # and the per-tile SMEM id offsets); at real sizes use the default 256.
    out = iembedding_forward(input_ids, table, gamma, beta, block_tokens=8)
    out = jax.block_until_ready(out)

    ref = _reference(input_ids, table, gamma, beta)
    assert out.shape == (batch, seq, embedding_dim)
    assert jnp.allclose(out, ref, atol=1e-5, rtol=1e-5), "mismatch vs reference"
    print("KERNEL_OK")
</pallas_src>

<mosaic_0001>
module attributes {stable_mosaic.version = 11 : i64} {
  func.func @_embed_layernorm_kernel(%arg0: i32, %arg1: memref<16xi32, #tpu.memory_space<smem>>, %arg2: memref<64x32xf32, #tpu.memory_space<vmem>>, %arg3: memref<1x32xf32, #tpu.memory_space<vmem>>, %arg4: memref<1x32xf32, #tpu.memory_space<vmem>>, %arg5: memref<8x32xf32, #tpu.memory_space<vmem>>, %arg6: memref<8x32xf32, #tpu.memory_space<vmem>>) attributes {dimension_semantics = [#tpu.dimension_semantics<parallel>], iteration_bounds = array<i64: 2>, scalar_prefetch = 1 : i64, scratch_operands = 1 : i64, tpu.core_type = #tpu.core_type<tc>, window_params = [{pipeline_mode = #tpu.pipeline_mode<synchronous>, transform_indices = @transform_0, window_bounds = array<i64: 64, 32>}, {pipeline_mode = #tpu.pipeline_mode<synchronous>, transform_indices = @transform_1, window_bounds = array<i64: 1, 32>}, {pipeline_mode = #tpu.pipeline_mode<synchronous>, transform_indices = @transform_2, window_bounds = array<i64: 1, 32>}, {transform_indices = @transform_3, window_bounds = array<i64: 8, 32>}]} {
    %c8_i32 = arith.constant 8 : i32
    %0 = arith.muli %arg0, %c8_i32 : i32
    %c0_i32 = arith.constant 0 : i32
    %1 = arith.addi %0, %c0_i32 : i32
    %2 = arith.index_cast %1 : i32 to index
    %3 = memref.load %arg1[%2] : memref<16xi32, #tpu.memory_space<smem>>
    %c0_i32_0 = arith.constant 0 : i32
    %4 = arith.maxsi %3, %c0_i32_0 : i32
    %c63_i32 = arith.constant 63 : i32
    %5 = arith.minsi %4, %c63_i32 : i32
    %6 = arith.index_cast %5 : i32 to index
    %c0 = arith.constant 0 : index
    %7 = vector.load %arg2[%6, %c0] : memref<64x32xf32, #tpu.memory_space<vmem>>, vector<1x32xf32>
    %8 = arith.index_cast %c0_i32 : i32 to index
    %c0_1 = arith.constant 0 : index
    %9 = vector.load %arg6[%8, %c0_1] : memref<8x32xf32, #tpu.memory_space<vmem>>, vector<1x32xf32>
    tpu.vector_store %arg6[%8, %c0_1], %7 {strides = array<i32>} : memref<8x32xf32, #tpu.memory_space<vmem>>, vector<1x32xf32>,
    %c1_i32 = arith.constant 1 : i32
    %10 = arith.addi %0, %c1_i32 : i32
    %11 = arith.index_cast %10 : i32 to index
    %12 = memref.load %arg1[%11] : memref<16xi32, #tpu.memory_space<smem>>
    %c0_i32_2 = arith.constant 0 : i32
    %13 = arith.maxsi %12, %c0_i32_2 : i32
    %c63_i32_3 = arith.constant 63 : i32
    %14 = arith.minsi %13, %c63_i32_3 : i32
    %15 = arith.index_cast %14 : i32 to index
    %c0_4 = arith.constant 0 : index
    %16 = vector.load %arg2[%15, %c0_4] : memref<64x32xf32, #tpu.memory_space<vmem>>, vector<1x32xf32>
    %17 = arith.index_cast %c1_i32 : i32 to index
    %c0_5 = arith.constant 0 : index
    %18 = vector.load %arg6[%17, %c0_5] : memref<8x32xf32, #tpu.memory_space<vmem>>, vector<1x32xf32>
    tpu.vector_store %arg6[%17, %c0_5], %16 {strides = array<i32>} : memref<8x32xf32, #tpu.memory_space<vmem>>, vector<1x32xf32>,
    %c2_i32 = arith.constant 2 : i32
    %19 = arith.addi %0, %c2_i32 : i32
    %20 = arith.index_cast %19 : i32 to index
    %21 = memref.load %arg1[%20] : memref<16xi32, #tpu.memory_space<smem>>
    %c0_i32_6 = arith.constant 0 : i32
    %22 = arith.maxsi %21, %c0_i32_6 : i32
    %c63_i32_7 = arith.constant 63 : i32
    %23 = arith.minsi %22, %c63_i32_7 : i32
    %24 = arith.index_cast %23 : i32 to index
    %c0_8 = arith.constant 0 : index
    %25 = vector.load %arg2[%24, %c0_8] : memref<64x32xf32, #tpu.memory_space<vmem>>, vector<1x32xf32>
    %26 = arith.index_cast %c2_i32 : i32 to index
    %c0_9 = arith.constant 0 : index
    %27 = vector.load %arg6[%26, %c0_9] : memref<8x32xf32, #tpu.memory_space<vmem>>, vector<1x32xf32>
    tpu.vector_store %arg6[%26, %c0_9], %25 {strides = array<i32>} : memref<8x32xf32, #tpu.memory_space<vmem>>, vector<1x32xf32>,
    %c3_i32 = arith.constant 3 : i32
    %28 = arith.addi %0, %c3_i32 : i32
    %29 = arith.index_cast %28 : i32 to index
    %30 = memref.load %arg1[%29] : memref<16xi32, #tpu.memory_space<smem>>
    %c0_i32_10 = arith.constant 0 : i32
    %31 = arith.maxsi %30, %c0_i32_10 : i32
    %c63_i32_11 = arith.constant 63 : i32
    %32 = arith.minsi %31, %c63_i32_11 : i32
    %33 = arith.index_cast %32 : i32 to index
    %c0_12 = arith.constant 0 : index
    %34 = vector.load %arg2[%33, %c0_12] : memref<64x32xf32, #tpu.memory_space<vmem>>, vector<1x32xf32>
    %35 = arith.index_cast %c3_i32 : i32 to index
    %c0_13 = arith.constant 0 : index
    %36 = vector.load %arg6[%35, %c0_13] : memref<8x32xf32, #tpu.memory_space<vmem>>, vector<1x32xf32>
    tpu.vector_store %arg6[%35, %c0_13], %34 {strides = array<i32>} : memref<8x32xf32, #tpu.memory_space<vmem>>, vector<1x32xf32>,
    %c4_i32 = arith.constant 4 : i32
    %37 = arith.addi %0, %c4_i32 : i32
    %38 = arith.index_cast %37 : i32 to index
    %39 = memref.load %arg1[%38] : memref<16xi32, #tpu.memory_space<smem>>
    %c0_i32_14 = arith.constant 0 : i32
    %40 = arith.maxsi %39, %c0_i32_14 : i32
    %c63_i32_15 = arith.constant 63 : i32
    %41 = arith.minsi %40, %c63_i32_15 : i32
    %42 = arith.index_cast %41 : i32 to index
    %c0_16 = arith.constant 0 : index
    %43 = vector.load %arg2[%42, %c0_16] : memref<64x32xf32, #tpu.memory_space<vmem>>, vector<1x32xf32>
    %44 = arith.index_cast %c4_i32 : i32 to index
    %c0_17 = arith.constant 0 : index
    %45 = vector.load %arg6[%44, %c0_17] : memref<8x32xf32, #tpu.memory_space<vmem>>, vector<1x32xf32>
    tpu.vector_store %arg6[%44, %c0_17], %43 {strides = array<i32>} : memref<8x32xf32, #tpu.memory_space<vmem>>, vector<1x32xf32>,
    %c5_i32 = arith.constant 5 : i32
    %46 = arith.addi %0, %c5_i32 : i32
    %47 = arith.index_cast %46 : i32 to index
    %48 = memref.load %arg1[%47] : memref<16xi32, #tpu.memory_space<smem>>
    %c0_i32_18 = arith.constant 0 : i32
    %49 = arith.maxsi %48, %c0_i32_18 : i32
    %c63_i32_19 = arith.constant 63 : i32
    %50 = arith.minsi %49, %c63_i32_19 : i32
    %51 = arith.index_cast %50 : i32 to index
    %c0_20 = arith.constant 0 : index
    %52 = vector.load %arg2[%51, %c0_20] : memref<64x32xf32, #tpu.memory_space<vmem>>, vector<1x32xf32>
    %53 = arith.index_cast %c5_i32 : i32 to index
    %c0_21 = arith.constant 0 : index
    %54 = vector.load %arg6[%53, %c0_21] : memref<8x32xf32, #tpu.memory_space<vmem>>, vector<1x32xf32>
    tpu.vector_store %arg6[%53, %c0_21], %52 {strides = array<i32>} : memref<8x32xf32, #tpu.memory_space<vmem>>, vector<1x32xf32>,
    %c6_i32 = arith.constant 6 : i32
    %55 = arith.addi %0, %c6_i32 : i32
    %56 = arith.index_cast %55 : i32 to index
    %57 = memref.load %arg1[%56] : memref<16xi32, #tpu.memory_space<smem>>
    %c0_i32_22 = arith.constant 0 : i32
    %58 = arith.maxsi %57, %c0_i32_22 : i32
    %c63_i32_23 = arith.constant 63 : i32
    %59 = arith.minsi %58, %c63_i32_23 : i32
    %60 = arith.index_cast %59 : i32 to index
    %c0_24 = arith.constant 0 : index
    %61 = vector.load %arg2[%60, %c0_24] : memref<64x32xf32, #tpu.memory_space<vmem>>, vector<1x32xf32>
    %62 = arith.index_cast %c6_i32 : i32 to index
    %c0_25 = arith.constant 0 : index
    %63 = vector.load %arg6[%62, %c0_25] : memref<8x32xf32, #tpu.memory_space<vmem>>, vector<1x32xf32>
    tpu.vector_store %arg6[%62, %c0_25], %61 {strides = array<i32>} : memref<8x32xf32, #tpu.memory_space<vmem>>, vector<1x32xf32>,
    %c7_i32 = arith.constant 7 : i32
    %64 = arith.addi %0, %c7_i32 : i32
    %65 = arith.index_cast %64 : i32 to index
    %66 = memref.load %arg1[%65] : memref<16xi32, #tpu.memory_space<smem>>
    %c0_i32_26 = arith.constant 0 : i32
    %67 = arith.maxsi %66, %c0_i32_26 : i32
    %c63_i32_27 = arith.constant 63 : i32
    %68 = arith.minsi %67, %c63_i32_27 : i32
    %69 = arith.index_cast %68 : i32 to index
    %c0_28 = arith.constant 0 : index
    %70 = vector.load %arg2[%69, %c0_28] : memref<64x32xf32, #tpu.memory_space<vmem>>, vector<1x32xf32>
    %71 = arith.index_cast %c7_i32 : i32 to index
    %c0_29 = arith.constant 0 : index
    %72 = vector.load %arg6[%71, %c0_29] : memref<8x32xf32, #tpu.memory_space<vmem>>, vector<1x32xf32>
    tpu.vector_store %arg6[%71, %c0_29], %70 {strides = array<i32>} : memref<8x32xf32, #tpu.memory_space<vmem>>, vector<1x32xf32>,
    %c8_i32_30 = arith.constant 8 : i32
    %c0_31 = arith.constant 0 : index
    %c0_32 = arith.constant 0 : index
    %73 = vector.load %arg6[%c0_31, %c0_32] : memref<8x32xf32, #tpu.memory_space<vmem>>, vector<8x32xf32>
    %cst = arith.constant dense<0.000000e+00> : vector<8xf32>
    %74 = vector.multi_reduction <add>, %73, %cst [1] : vector<8x32xf32> to vector<8xf32>
    %75 = vector.shape_cast %74 : vector<8xf32> to vector<8x1xf32>
    %cst_33 = arith.constant 3.200000e+01 : f32
    %76 = vector.broadcast %cst_33 : f32 to vector<8x1xf32>
    %77 = arith.divf %75, %76 : vector<8x1xf32>
    %78 = vector.broadcast %77 : vector<8x1xf32> to vector<8x32xf32>
    %79 = arith.subf %73, %78 : vector<8x32xf32>
    %80 = arith.mulf %79, %79 : vector<8x32xf32>
    %cst_34 = arith.constant dense<0.000000e+00> : vector<8xf32>
    %81 = vector.multi_reduction <add>, %80, %cst_34 [1] : vector<8x32xf32> to vector<8xf32>
    %82 = vector.shape_cast %81 : vector<8xf32> to vector<8x1xf32>
    %cst_35 = arith.constant 3.200000e+01 : f32
    %83 = vector.broadcast %cst_35 : f32 to vector<8x1xf32>
    %84 = arith.divf %82, %83 : vector<8x1xf32>
    %cst_36 = arith.constant 9.99999974E-6 : f32
    %85 = vector.broadcast %cst_36 : f32 to vector<8x1xf32>
    %86 = arith.addf %84, %85 : vector<8x1xf32>
    %87 = math.rsqrt %86 : vector<8x1xf32>
    %88 = vector.broadcast %87 : vector<8x1xf32> to vector<8x32xf32>
    %89 = arith.mulf %79, %88 : vector<8x32xf32>
    %c0_37 = arith.constant 0 : index
    %c0_38 = arith.constant 0 : index
    %90 = vector.load %arg3[%c0_37, %c0_38] : memref<1x32xf32, #tpu.memory_space<vmem>>, vector<1x32xf32>
    %91 = vector.broadcast %90 : vector<1x32xf32> to vector<8x32xf32>
    %92 = arith.mulf %89, %91 : vector<8x32xf32>
    %c0_39 = arith.constant 0 : index
    %c0_40 = arith.constant 0 : index
    %93 = vector.load %arg4[%c0_39, %c0_40] : memref<1x32xf32, #tpu.memory_space<vmem>>, vector<1x32xf32>
    %94 = vector.broadcast %93 : vector<1x32xf32> to vector<8x32xf32>
    %95 = arith.addf %92, %94 : vector<8x32xf32>
    %c0_41 = arith.constant 0 : index
    %c0_42 = arith.constant 0 : index
    %96 = vector.load %arg5[%c0_41, %c0_42] : memref<8x32xf32, #tpu.memory_space<vmem>>, vector<8x32xf32>
    tpu.vector_store %arg5[%c0_41, %c0_42], %95 {strides = array<i32>} : memref<8x32xf32, #tpu.memory_space<vmem>>, vector<8x32xf32>,
    return
  }
  func.func @transform_0(%arg0: i32, %arg1: memref<16xi32, #tpu.memory_space<smem>>) -> (i32, i32) {
    %c0_i32 = arith.constant 0 : i32
    %c0_i32_0 = arith.constant 0 : i32
    %c0_i32_1 = arith.constant 0 : i32
    return %c0_i32, %c0_i32_0 : i32, i32
  }
  func.func @transform_1(%arg0: i32, %arg1: memref<16xi32, #tpu.memory_space<smem>>) -> (i32, i32) {
    %c0_i32 = arith.constant 0 : i32
    %c0_i32_0 = arith.constant 0 : i32
    %c0_i32_1 = arith.constant 0 : i32
    return %c0_i32, %c0_i32_0 : i32, i32
  }
  func.func @transform_2(%arg0: i32, %arg1: memref<16xi32, #tpu.memory_space<smem>>) -> (i32, i32) {
    %c0_i32 = arith.constant 0 : i32
    %c0_i32_0 = arith.constant 0 : i32
    %c0_i32_1 = arith.constant 0 : i32
    return %c0_i32, %c0_i32_0 : i32, i32
  }
  func.func @transform_3(%arg0: i32, %arg1: memref<16xi32, #tpu.memory_space<smem>>) -> (i32, i32) {
    %c0_i32 = arith.constant 0 : i32
    %c0_i32_0 = arith.constant 0 : i32
    return %arg0, %c0_i32 : i32, i32
  }
}

</mosaic_0001>

<llo_original>
// kernel: tpu_custom_call.1
$region0: #{tpu_custom_call.1}
  #allocation0 [shape = 'u32[]', space=smem, size = 0x4, offset = 0x4, fixed_abs, tag = 'smem constant byte address 0x4 - core index']
  #allocation1 [shape = 'u32[72,128]{1,0:T(1,128)}', space=vmem, size = 0x9000, scoped, tag = 'internal scratch']
  #allocation2 [shape = 'f32[8,32]{1,0:T(8,128)}', space=vmem, size = 0x1000, scoped, tag = 'scratch operand']
  #allocation3 [shape = 's32[1]{0}', space=sflag, size = 0x4, scoped, tag = 'scoped memory for tpu_custom_call.1']
  #allocation4 [shape = 'u8[512]{0}', space=smem, size = 0x200, scoped, tag = 'prefetched SMEM operand 0']
  %s0 = inlined_call_operand.vmem [shape: s32[16], index: 0, kind: input, shape index: {}]
  %s1 = inlined_call_operand.vmem [shape: f32[64,32], index: 1, kind: input, shape index: {}]
  %s2 = inlined_call_operand.vmem [shape: f32[1,32], index: 2, kind: input, shape index: {}]
  %s3 = inlined_call_operand.vmem [shape: f32[1,32], index: 3, kind: input, shape index: {}]
  %s4 = inlined_call_operand.hbm [shape: f32[16,32], index: 4, kind: output, shape index: {}]
  %s5 = sld [smem:[#allocation0]]
  $region45: #{tpu_custom_call.1} parent=0
    _
  %s7 = ssub.s32 1, %s5
  %s8 = scalar_select 0, %s7, %s5
  %s10 = sshll.u32 %s0, 4
  %s11 = int_to_ptr.vmem [resolvable:$true] %s10
  %13 = dma.vmem_to_smem %s11, 16, [#allocation4], [#allocation3]
  %15 = dma.done [#allocation3], 16
  %16 = sfence
  $region1: #{tpu_custom_call.1} parent=0
    #allocation5 [shape = 'u8[8192]{0}', space=vmem, size = 0x2000, scoped, tag = 'output window, operand 0']
    #allocation6 [shape = 's32[2]{0}', space=sflag, size = 0x8, scoped, tag = 'scoped memory for tpu_custom_call.1']
    %17 = vsyncpa [#allocation6], 0
    %s18 = scalar_lea.sflag [#allocation6], 1
    %19 = vsyncpa %s18, 0
    loop: start=0, step=1, limit=4
    $region2: #{tpu_custom_call.1} parent=1 // loop_pre_header
      _
    $region3: #{tpu_custom_call.1} parent=1 // loop_header
      %s21 = sphi 0, %s25
      %p22 = scmp.ge.s32.totalorder %s21, 4
      %s29 = sphi 0, %s29
      %s31 = sphi 0, %s29
      %s32 = sphi 0, %s31
      %s46 = sphi 0, %s32
      %s50 = sphi 0, %s50
      %s52 = sphi 0, %s50
      %s53 = sphi 0, %s52
      %s67 = sphi 0, %s53
      %s71 = sphi 0, %s71
      %s73 = sphi 0, %s71
      %s74 = sphi 0, %s73
      %s88 = sphi 0, %s74
      %s94 = sphi 0, %s96
      %s97 = sphi 0, %s94
      %s98 = sphi 0, %s97
      %s114 = sphi 0, %s98
    $region4: #{tpu_custom_call.1} parent=1 // loop_header_branch
      %24 = sbr.rel (%p22) target = $region8
    $region5: #{tpu_custom_call.1} parent=1 // loop_body
      %s26 = ssub.s32 %s21, 1
      %s27 = ssub.s32 %s21, 2
      %s28 = sadd.s32 %s21, 1
      %s30 = sadd.s32 %s29, 1
      %p33 = scmp.eq.s32.totalorder %s21, 1
      %p34 = scmp.ne.s32.totalorder %s29, %s31
      %p35 = scmp.eq.s32.totalorder %s21, 0
      %p36 = por %p34, %p35
      %p37 = scmp.ne.s32.totalorder %s29, %s31
      %p38 = scmp.eq.s32.totalorder %s26, 1
      %p39 = por %p37, %p38
      %p40 = scmp.ne.s32.totalorder %s31, %s32
      %p41 = scmp.eq.s32.totalorder %s26, 0
      %p42 = por %p40, %p41
      %p43 = scmp.ne.s32.totalorder %s31, %s32
      %p44 = scmp.eq.s32.totalorder %s27, 1
      %p45 = por %p43, %p44
      %p47 = scmp.ne.s32.totalorder %s32, %s46
      %p48 = scmp.eq.s32.totalorder %s27, 0
      %p49 = por %p47, %p48
      %s51 = sadd.s32 %s50, 1
      %p54 = scmp.eq.s32.totalorder %s21, 1
      %p55 = scmp.ne.s32.totalorder %s50, %s52
      %p56 = scmp.eq.s32.totalorder %s21, 0
      %p57 = por %p55, %p56
      %p58 = scmp.ne.s32.totalorder %s50, %s52
      %p59 = scmp.eq.s32.totalorder %s26, 1
      %p60 = por %p58, %p59
      %p61 = scmp.ne.s32.totalorder %s52, %s53
      %p62 = scmp.eq.s32.totalorder %s26, 0
      %p63 = por %p61, %p62
      %p64 = scmp.ne.s32.totalorder %s52, %s53
      %p65 = scmp.eq.s32.totalorder %s27, 1
      %p66 = por %p64, %p65
      %p68 = scmp.ne.s32.totalorder %s53, %s67
      %p69 = scmp.eq.s32.totalorder %s27, 0
      %p70 = por %p68, %p69
      %s72 = sadd.s32 %s71, 1
      %p75 = scmp.eq.s32.totalorder %s21, 1
      %p76 = scmp.ne.s32.totalorder %s71, %s73
      %p77 = scmp.eq.s32.totalorder %s21, 0
      %p78 = por %p76, %p77
      %p79 = scmp.ne.s32.totalorder %s71, %s73
      %p80 = scmp.eq.s32.totalorder %s26, 1
      %p81 = por %p79, %p80
      %p82 = scmp.ne.s32.totalorder %s73, %s74
      %p83 = scmp.eq.s32.totalorder %s26, 0
      %p84 = por %p82, %p83
      %p85 = scmp.ne.s32.totalorder %s73, %s74
      %p86 = scmp.eq.s32.totalorder %s27, 1
      %p87 = por %p85, %p86
      %p89 = scmp.ne.s32.totalorder %s74, %s88
      %p90 = scmp.eq.s32.totalorder %s27, 0
      %p91 = por %p89, %p90
      %s92 = ssub.s32 %s21, %s28
      %p93 = scmp.eq.s32.totalorder %s92, 0
      %s95 = sadd.s32 %s94, 1
      %s96 = scalar_select %p93, %s94, %s95
      %p99 = pneg %p93
      %p100 = scmp.eq.s32.totalorder %s21, 1
      %p101 = por %p99, %p100
      %p102 = scmp.ne.s32.totalorder %s94, %s97
      %p103 = scmp.eq.s32.totalorder %s21, 0
      %p104 = por %p102, %p103
      %p105 = scmp.ne.s32.totalorder %s94, %s97
      %p106 = scmp.eq.s32.totalorder %s26, 1
      %p107 = por %p105, %p106
      %p108 = scmp.ne.s32.totalorder %s97, %s98
      %p109 = scmp.eq.s32.totalorder %s26, 0
      %p110 = por %p108, %p109
      %p111 = scmp.ne.s32.totalorder %s97, %s98
      %p112 = scmp.eq.s32.totalorder %s27, 1
      %p113 = por %p111, %p112
      %p115 = scmp.ne.s32.totalorder %s98, %s114
      %p116 = scmp.eq.s32.totalorder %s27, 0
      %p117 = por %p115, %p116
      %p118 = scmp.le.s32.totalorder 1, %s21
      %p119 = scmp.lt.s32.totalorder %s21, 3
      %p120 = pnand %p118, %p119
      %p121 = pneg %p120
      // Predicated region
      $region9: #{tpu_custom_call.1} parent=5 // pred_check
        _
      $region10: #{tpu_custom_call.1} parent=5 // pred_check_branch
        %123 = sbr.rel (%p120) target = $region12
      $region11: #{tpu_custom_call.1} parent=5 // pred_region
        %s124 = ssub.s32 %s21, 1
        // Predicated region
        $region13: #{tpu_custom_call.1} parent=11 // pred_check
          %p125 = pneg %p42
        $region14: #{tpu_custom_call.1} parent=11 // pred_check_branch
          %127 = sbr.rel (%p125) target = $region16
        $region15: #{tpu_custom_call.1} parent=11 // pred_region
          _
        $region16: #{tpu_custom_call.1} parent=11 // pred_fallthru
          _
        // Predicated region
        $region17: #{tpu_custom_call.1} parent=11 // pred_check
          %p128 = pneg %p63
        $region18: #{tpu_custom_call.1} parent=11 // pred_check_branch
          %130 = sbr.rel (%p128) target = $region20
        $region19: #{tpu_custom_call.1} parent=11 // pred_region
          _
        $region20: #{tpu_custom_call.1} parent=11 // pred_fallthru
          _
        // Predicated region
        $region21: #{tpu_custom_call.1} parent=11 // pred_check
          %p131 = pneg %p84
        $region22: #{tpu_custom_call.1} parent=11 // pred_check_branch
          %133 = sbr.rel (%p131) target = $region24
        $region23: #{tpu_custom_call.1} parent=11 // pred_region
          _
        $region24: #{tpu_custom_call.1} parent=11 // pred_fallthru
          _
      $region12: #{tpu_custom_call.1} parent=5 // pred_fallthru
        _
      %p134 = scmp.lt.s32.totalorder %s21, 2
      // Predicated region
      $region25: #{tpu_custom_call.1} parent=5 // pred_check
        %p135 = pneg %p134
      $region26: #{tpu_custom_call.1} parent=5 // pred_check_branch
        %137 = sbr.rel (%p135) target = $region28
      $region27: #{tpu_custom_call.1} parent=5 // pred_region
        _
      $region28: #{tpu_custom_call.1} parent=5 // pred_fallthru
        _
      %p138 = scmp.le.s32.totalorder 1, %s21
      %p139 = scmp.lt.s32.totalorder %s21, 3
      %p140 = pnand %p138, %p139
      %p141 = pneg %p140
      // Predicated region
      $region29: #{tpu_custom_call.1} parent=5 // pred_check
        _
      $region30: #{tpu_custom_call.1} parent=5 // pred_check_branch
        %143 = sbr.rel (%p140) target = $region32
      $region31: #{tpu_custom_call.1} parent=5 // pred_region
        %s144 = ssub.s32 %s21, 1
        %p145 = pneg %p42
        %p146 = pneg %p39
        %p147 = pneg %p63
        %p148 = pneg %p60
        %p149 = pneg %p84
        %p150 = pneg %p81
        %p151 = pneg %p110
        %p152 = pneg %p107
        %s153 = sand.u32 %s97, 1
        %s154 = scalar_lea.sflag [#allocation6], %s153
        %s155 = sand.u32 %s97, 1
        %s156 = smul.addr %s155, 8
        %s157 = scalar_lea.vmem [#allocation5], %s156
        %s158 = smul.u32 %s26, 8
        %s159 = sld [smem:[#allocation4 + %s158]]
        %p160 = scmp.gt.s32.totalorder %s159, 0
        %s161 = scalar_select %p160, %s159, 0
        %p162 = scmp.lt.s32.totalorder %s161, 63
        %s163 = scalar_select %p162, %s161, 63
        %s164 = scalar_lea.vmem %s1, %s163
        %v165 = vld [vmem:[%s164] sm:$0x1]
        %vm166 = vcmask 253952
        %167 = vst.msk [vmem:[#allocation2] sm:$0x1] %vm166, %v165
        %s168 = sadd.s32 %s158, 1
        %s169 = sld [smem:[#allocation4 + %s168]]
        %p170 = scmp.gt.s32.totalorder %s169, 0
        %s171 = scalar_select %p170, %s169, 0
        %p172 = scmp.lt.s32.totalorder %s171, 63
        %s173 = scalar_select %p172, %s171, 63
        %s174 = scalar_lea.vmem %s1, %s173
        %v175 = vld [vmem:[%s174] sm:$0x1]
        %176 = vst.msk [vmem:[#allocation2 + $0x1] sm:$0x1] %vm166, %v175
        %s177 = sadd.s32 %s158, 2
        %s178 = sld [smem:[#allocation4 + %s177]]
        %p179 = scmp.gt.s32.totalorder %s178, 0
        %s180 = scalar_select %p179, %s178, 0
        %p181 = scmp.lt.s32.totalorder %s180, 63
        %s182 = scalar_select %p181, %s180, 63
        %s183 = scalar_lea.vmem %s1, %s182
        %v184 = vld [vmem:[%s183] sm:$0x1]
        %185 = vst.msk [vmem:[#allocation2 + $0x2] sm:$0x1] %vm166, %v184
        %s186 = sadd.s32 %s158, 3
        %s187 = sld [smem:[#allocation4 + %s186]]
        %p188 = scmp.gt.s32.totalorder %s187, 0
        %s189 = scalar_select %p188, %s187, 0
        %p190 = scmp.lt.s32.totalorder %s189, 63
        %s191 = scalar_select %p190, %s189, 63
        %s192 = scalar_lea.vmem %s1, %s191
        %v193 = vld [vmem:[%s192] sm:$0x1]
        %194 = vst.msk [vmem:[#allocation2 + $0x3] sm:$0x1] %vm166, %v193
        %s195 = sadd.s32 %s158, 4
        %s196 = sld [smem:[#allocation4 + %s195]]
        %p197 = scmp.gt.s32.totalorder %s196, 0
        %s198 = scalar_select %p197, %s196, 0
        %p199 = scmp.lt.s32.totalorder %s198, 63
        %s200 = scalar_select %p199, %s198, 63
        %s201 = scalar_lea.vmem %s1, %s200
        %v202 = vld [vmem:[%s201] sm:$0x1]
        %203 = vst.msk [vmem:[#allocation2 + $0x4] sm:$0x1] %vm166, %v202
        %s204 = sadd.s32 %s158, 5
        %s205 = sld [smem:[#allocation4 + %s204]]
        %p206 = scmp.gt.s32.totalorder %s205, 0
        %s207 = scalar_select %p206, %s205, 0
        %p208 = scmp.lt.s32.totalorder %s207, 63
        %s209 = scalar_select %p208, %s207, 63
        %s210 = scalar_lea.vmem %s1, %s209
        %v211 = vld [vmem:[%s210] sm:$0x1]
        %212 = vst.msk [vmem:[#allocation2 + $0x5] sm:$0x1] %vm166, %v211
        %s213 = sadd.s32 %s158, 6
        %s214 = sld [smem:[#allocation4 + %s213]]
        %p215 = scmp.gt.s32.totalorder %s214, 0
        %s216 = scalar_select %p215, %s214, 0
        %p217 = scmp.lt.s32.totalorder %s216, 63
        %s218 = scalar_select %p217, %s216, 63
        %s219 = scalar_lea.vmem %s1, %s218
        %v220 = vld [vmem:[%s219] sm:$0x1]
        %221 = vst.msk [vmem:[#allocation2 + $0x6] sm:$0x1] %vm166, %v220
        %s222 = sadd.s32 %s158, 7
        %s223 = sld [smem:[#allocation4 + %s222]]
        %p224 = scmp.gt.s32.totalorder %s223, 0
        %s225 = scalar_select %p224, %s223, 0
        %p226 = scmp.lt.s32.totalorder %s225, 63
        %s227 = scalar_select %p226, %s225, 63
        %s228 = scalar_lea.vmem %s1, %s227
        %v229 = vld [vmem:[%s228] sm:$0x1]
        %230 = vst.msk [vmem:[#allocation2 + $0x7] sm:$0x1] %vm166, %v229
        %v231 = vld [vmem:[#allocation2] sm:$0xff]
        %vm232 = vcmask 261120
        %v233 = vsel %vm232, %v231, 0.0
        %234 = vadd.xlane.f32.xlu0 %v233
        %v235 = vpop.xlane.xlu0 %234
        %v236 = vrcp.pop 32.0
        %v237 = vmul.f32 32.0, %v236
        %v238 = vsub.f32 1.0, %v237
        %v239 = vmul.f32 %v236, %v238
        %v240 = vadd.f32 %v236, %v239
        %vm241 = vweird.f32 %v236
        %v242 = vsel %vm241, %v236, %v240
        %v243 = vmul.f32 %v235, %v242
        %v244 = vsub.f32 %v231, %v243
        %v245 = vmul.f32 %v244, %v244
        %v246 = vsel %vm232, %v245, 0.0
        %247 = vadd.xlane.f32.xlu0 %v246
        %v248 = vpop.xlane.xlu0 %247
        %v249 = vmul.f32 %v248, %v242
        %v250 = vadd.f32 %v249, 1e-05
        %v251 = vrsqrt.pop %v250
        %v252 = vmul.f32 %v251, %v250
        %v253 = vmul.f32 %v252, %v251
        %v254 = vmul.f32 0.5, %v253
        %v255 = vsub.f32 1.5, %v254
        %v256 = vmul.f32 %v251, %v255
        %vm257 = vweird.f32 %v250
        %vm258 = vweird.f32 %v251
        %vm259 = vmor %vm257, %vm258
        %v260 = vsel %vm259, %v251, %v256
        %v261 = vmul.f32 %v244, %v260
        %v262 = vld [vmem:[%s2] sm:$0x1]
        %v264 = vperm.slane %v262, 0
        %v266 = vmul.f32 %v261, %v264
        %v267 = vld [vmem:[%s3] sm:$0x1]
        %v269 = vperm.slane %v267, 0
        %v271 = vadd.f32 %v266, %v269
        %272 = vst.msk [vmem:[%s157] sm:$0xff] %vm232, %v271
        %s273 = sand.u32 %s97, 1
        %s274 = scalar_lea.sflag [#allocation6], %s273
        %s275 = sand.u32 %s97, 1
        %s276 = smul.addr %s275, 8
        %s277 = scalar_lea.vmem [#allocation5], %s276
        // Predicated region
        $region33: #{tpu_custom_call.1} parent=31 // pred_check
          %p278 = pneg %p107
        $region34: #{tpu_custom_call.1} parent=31 // pred_check_branch
          %280 = sbr.rel (%p278) target = $region36
        $region35: #{tpu_custom_call.1} parent=31 // pred_region
          %282 = vsyncadd %s274, 0
          %s283 = smul.addr %s26, 8
          %s284 = scalar_lea.hbm %s4, %s283
          %s286 = sshll.u32 %s277, 4
          %s287 = int_to_ptr.vmem [resolvable:$true] %s286
          %s288 = sshll.u32 %s284, 4
          %s289 = int_to_ptr.hbm [resolvable:$true] %s288
          %291 = dma.vmem_to_hbm [thread:$0]  %s287, 128, %s289, %s274
        $region36: #{tpu_custom_call.1} parent=31 // pred_fallthru
          _
      $region32: #{tpu_custom_call.1} parent=5 // pred_fallthru
        _
      %p292 = scmp.le.s32.totalorder 2, %s21
      // Predicated region
      $region37: #{tpu_custom_call.1} parent=5 // pred_check
        %p293 = pneg %p292
      $region38: #{tpu_custom_call.1} parent=5 // pred_check_branch
        %295 = sbr.rel (%p293) target = $region40
      $region39: #{tpu_custom_call.1} parent=5 // pred_region
        %s296 = ssub.s32 %s21, 2
        // Predicated region
        $region41: #{tpu_custom_call.1} parent=39 // pred_check
          %p297 = pneg %p113
        $region42: #{tpu_custom_call.1} parent=39 // pred_check_branch
          %299 = sbr.rel (%p297) target = $region44
        $region43: #{tpu_custom_call.1} parent=39 // pred_region
          %s300 = sand.u32 %s98, 1
          %s301 = scalar_lea.sflag [#allocation6], %s300
          %s302 = sand.u32 %s98, 1
          %s303 = smul.addr %s302, 8
          %s304 = scalar_lea.vmem [#allocation5], %s303
          %306 = dma.done %s301, 128
        $region44: #{tpu_custom_call.1} parent=39 // pred_fallthru
          _
      $region40: #{tpu_custom_call.1} parent=5 // pred_fallthru
        _
    $region6: #{tpu_custom_call.1} parent=1 // loop_footer
      %s25 = sadd.s32 1, %s21
    $region7: #{tpu_custom_call.1} parent=1 // loop_footer_branch
      %20 = sbr.rel target = $region3
    $region8: #{tpu_custom_call.1} parent=1 // loop_exit
      _
    %307 = vsyncpa [#allocation6], 1
    %s308 = scalar_lea.sflag [#allocation6], 1
    %309 = vsyncpa %s308, 1

</llo_original>
